<compile_context>
chip_gen: v7x
topology: tpu7x:2x2x1
jax: 0.10.0
libtpu: 0.0.40
codegen_flags: <defaults>
</compile_context>

<pallas_src>
import numpy as np
import jax
import jax.numpy as jnp
from jax.experimental import pallas as pl
from jax.experimental.pallas import tpu as pltpu

LANE = 128          # TPU lane width
SUBLANES = 8        # f32 sublanes per vreg
TS_MAX = 1024       # max lane-tile (columns of the packed (8, n_sub) slab) per grid step


def rot_np(alpha):
    """float32 replica of the torch `rot` helper (used only by the reference)."""
    M = np.eye(6, dtype=np.float32)
    C = np.cos(np.float32(alpha)).astype(np.float32)
    S = np.sin(np.float32(alpha)).astype(np.float32)
    M[0, 0] = C
    M[0, 2] = S
    M[1, 1] = C
    M[1, 3] = S
    M[2, 0] = -S
    M[2, 2] = C
    M[3, 1] = -S
    M[3, 3] = C
    return M


def quad_kernel(L_ref, k1_ref, out_ref):
    # L_ref: (1,) f32 in SMEM; k1_ref: (8, TS) f32 in VMEM;
    # out_ref: (36, 8, TS) f32 in VMEM, row r = 6*i + j holds M[..., i, j].
    k1 = k1_ref[...]                                        # (8, TS)
    k1 = jnp.where(jnp.abs(k1) < 1e-6, k1 + 1e-6, k1)
    focusing = k1 >= 0.0
    mag_k1 = jnp.where(k1 < 0.0, -k1, k1)
    k = jnp.sqrt(mag_k1)
    kl = L_ref[0] * k

    cos_kl = jnp.cos(kl)
    sin_kl = jnp.sin(kl)
    e = jnp.exp(kl)
    inv_e = pl.reciprocal(e)               # exp(-kl) via one shared EUP reciprocal
    cosh_kl = 0.5 * (e + inv_e)
    sinh_kl = 0.5 * (e - inv_e)
    inv_k = pl.reciprocal(k)               # shared by both "/ k" matrix entries

    zeros = jnp.zeros_like(kl)
    ones = jnp.ones_like(kl)

    # rot(-pi/2) @ M @ rot(pi/2) == plane swap: for K1 < 0 the cosh/sinh block
    # moves into the (0,1) plane and the cos/sin block into the (2,3) plane.
    m00 = jnp.where(focusing, cos_kl, cosh_kl)              # [0,0] and [1,1]
    m01 = jnp.where(focusing, sin_kl, sinh_kl) * inv_k      # [0,1]
    m10 = jnp.where(focusing, -sin_kl, sinh_kl) * k         # [1,0]
    m22 = jnp.where(focusing, cosh_kl, cos_kl)              # [2,2] and [3,3]
    m23 = jnp.where(focusing, sinh_kl, sin_kl) * inv_k      # [2,3]
    m32 = jnp.where(focusing, sinh_kl, -sin_kl) * k         # [3,2]

    nontrivial = {
        0: m00, 1: m01, 6: m10, 7: m00,
        14: m22, 15: m23, 20: m32, 21: m22,
        28: ones, 35: ones,
    }
    # 36 full-width (8, TS) stores, unrolled at trace time; each row is written
    # exactly once (no redundant blend / rewrite).
    for r in range(36):
        out_ref[r] = nontrivial.get(r, zeros)


def torch_quad_matrix(K1, L, ts_max=TS_MAX):
    """JAX/Pallas equivalent of TorchQuad.get_matrix(K1) with scalar length L."""
    K1 = jnp.asarray(K1, jnp.float32)
    orig_shape = K1.shape
    k1_flat = K1.reshape(-1)
    n = int(k1_flat.shape[0])

    # Sublane-packed layout: flat K1 -> (8, n_sub_pad), n_sub_pad multiple of ts.
    n_sub = max(1, pl.cdiv(n, SUBLANES))
    ts = max(LANE, min(ts_max, ((n_sub + LANE - 1) // LANE) * LANE))
    n_sub_pad = ((n_sub + ts - 1) // ts) * ts
    n_pad = SUBLANES * n_sub_pad

    k1p = (jnp.zeros((n_pad,), jnp.float32)
           .at[:n].set(k1_flat)
           .reshape(SUBLANES, n_sub_pad))
    L_arr = jnp.asarray(L, jnp.float32).reshape(1)

    grid = (n_sub_pad // ts,)
    out = pl.pallas_call(
        quad_kernel,
        out_shape=jax.ShapeDtypeStruct((36, SUBLANES, n_sub_pad), jnp.float32),
        grid_spec=pltpu.PrefetchScalarGridSpec(
            num_scalar_prefetch=0,
            grid=grid,
            in_specs=[
                pl.BlockSpec(memory_space=pltpu.MemorySpace.SMEM),      # L scalar
                pl.BlockSpec((SUBLANES, ts), lambda i: (0, i)),         # K1 slab tile
            ],
            out_specs=pl.BlockSpec((36, SUBLANES, ts), lambda i: (0, 0, i)),
        ),
        compiler_params=pltpu.CompilerParams(
            dimension_semantics=("parallel",)),
    )(L_arr, k1p)

    # (36, 8, n_sub_pad) -> (36, n_pad) is a free contiguous reshape; the
    # transpose to the torch-facing (N, 6, 6) layout is left to XLA on purpose
    # (a 6-wide last dim from the kernel would force masked stores).
    M = out.reshape(36, n_pad)[:, :n].T.reshape(orig_shape + (6, 6))
    return M


# ---------------- pure-JAX reference (mirrors the torch code) ----------------
def reference(K1, L):
    K1 = jnp.asarray(K1, jnp.float32)
    K1 = jnp.where(jnp.abs(K1) < 1e-6, K1 + 1e-6, K1)
    mag = jnp.where(K1 < 0.0, -K1, K1)
    k = jnp.sqrt(mag)
    kl = L * k
    M = jnp.broadcast_to(jnp.eye(6, dtype=jnp.float32), K1.shape + (6, 6))
    M = M.at[..., 0, 0].set(jnp.cos(kl))
    M = M.at[..., 0, 1].set(jnp.sin(kl) / k)
    M = M.at[..., 1, 0].set(-k * jnp.sin(kl))
    M = M.at[..., 1, 1].set(jnp.cos(kl))
    M = M.at[..., 2, 2].set(jnp.cosh(kl))
    M = M.at[..., 2, 3].set(jnp.sinh(kl) / k)
    M = M.at[..., 3, 2].set(k * jnp.sinh(kl))
    M = M.at[..., 3, 3].set(jnp.cosh(kl))
    Rm = jnp.asarray(rot_np(-np.pi / 2.0))
    Rp = jnp.asarray(rot_np(np.pi / 2.0))
    M_rot = jnp.matmul(jnp.matmul(Rm, M), Rp)
    sel = (K1 >= 0.0)[..., None, None]
    return jnp.where(sel, M, M_rot)


if __name__ == "__main__":
    # Deterministic "parameters": K1 is a small batch of focusing strengths,
    # L is the (scalar) quad length — analogous to the registered nn.Parameters.
    key = jax.random.PRNGKey(0)
    N = 8
    K1 = jax.random.uniform(key, (N,), jnp.float32, minval=-5.0, maxval=5.0)
    L = jnp.float32(0.1)

    M = torch_quad_matrix(K1, L)
    M = jax.block_until_ready(M)

    ref = reference(K1, L)
    assert M.shape == (N, 6, 6)
    np.testing.assert_allclose(np.asarray(M), np.asarray(ref),
                               rtol=1e-5, atol=1e-5)
    print("KERNEL_OK")
</pallas_src>

<mosaic_0001>
module attributes {stable_mosaic.version = 11 : i64} {
  func.func @quad_kernel(%arg0: i32, %arg1: memref<1xf32, #tpu.memory_space<smem>>, %arg2: memref<8x128xf32, #tpu.memory_space<vmem>>, %arg3: memref<36x8x128xf32, #tpu.memory_space<vmem>>) attributes {dimension_semantics = [#tpu.dimension_semantics<parallel>], iteration_bounds = array<i64: 1>, scalar_prefetch = 0 : i64, scratch_operands = 0 : i64, tpu.core_type = #tpu.core_type<tc>, window_params = [{transform_indices = @transform_0, window_bounds = array<i64: 1>}, {transform_indices = @transform_1, window_bounds = array<i64: 8, 128>}, {transform_indices = @transform_2, window_bounds = array<i64: 36, 8, 128>}]} {
    %c0 = arith.constant 0 : index
    %c0_0 = arith.constant 0 : index
    %0 = vector.load %arg2[%c0, %c0_0] : memref<8x128xf32, #tpu.memory_space<vmem>>, vector<8x128xf32>
    %1 = math.absf %0 : vector<8x128xf32>
    %cst = arith.constant 9.99999997E-7 : f32
    %2 = vector.broadcast %cst : f32 to vector<8x128xf32>
    %3 = arith.cmpf olt, %1, %2 : vector<8x128xf32>
    %cst_1 = arith.constant 9.99999997E-7 : f32
    %4 = vector.broadcast %cst_1 : f32 to vector<8x128xf32>
    %5 = arith.addf %0, %4 : vector<8x128xf32>
    %6 = arith.select %3, %5, %0 : vector<8x128xi1>, vector<8x128xf32>
    %cst_2 = arith.constant 0.000000e+00 : f32
    %7 = vector.broadcast %cst_2 : f32 to vector<8x128xf32>
    %8 = arith.cmpf oge, %6, %7 : vector<8x128xf32>
    %cst_3 = arith.constant 0.000000e+00 : f32
    %9 = vector.broadcast %cst_3 : f32 to vector<8x128xf32>
    %10 = arith.cmpf olt, %6, %9 : vector<8x128xf32>
    %cst_4 = arith.constant 0.000000e+00 : f32
    %11 = vector.broadcast %cst_4 : f32 to vector<8x128xf32>
    %12 = arith.subf %11, %6 : vector<8x128xf32>
    %13 = arith.select %10, %12, %6 : vector<8x128xi1>, vector<8x128xf32>
    %14 = math.sqrt %13 : vector<8x128xf32>
    %c0_5 = arith.constant 0 : index
    %15 = memref.load %arg1[%c0_5] : memref<1xf32, #tpu.memory_space<smem>>
    %16 = vector.broadcast %15 : f32 to vector<8x128xf32>
    %17 = arith.mulf %16, %14 : vector<8x128xf32>
    %18 = math.cos %17 : vector<8x128xf32>
    %19 = math.sin %17 : vector<8x128xf32>
    %20 = math.exp %17 : vector<8x128xf32>
    %21 = tpu.reciprocal %20 : vector<8x128xf32> -> vector<8x128xf32>
    %22 = arith.addf %20, %21 : vector<8x128xf32>
    %cst_6 = arith.constant 5.000000e-01 : f32
    %23 = vector.broadcast %cst_6 : f32 to vector<8x128xf32>
    %24 = arith.mulf %23, %22 : vector<8x128xf32>
    %25 = arith.subf %20, %21 : vector<8x128xf32>
    %cst_7 = arith.constant 5.000000e-01 : f32
    %26 = vector.broadcast %cst_7 : f32 to vector<8x128xf32>
    %27 = arith.mulf %26, %25 : vector<8x128xf32>
    %28 = tpu.reciprocal %14 : vector<8x128xf32> -> vector<8x128xf32>
    %cst_8 = arith.constant 0.000000e+00 : f32
    %29 = vector.broadcast %cst_8 : f32 to vector<8x128xf32>
    %cst_9 = arith.constant 1.000000e+00 : f32
    %30 = vector.broadcast %cst_9 : f32 to vector<8x128xf32>
    %31 = arith.select %8, %18, %24 : vector<8x128xi1>, vector<8x128xf32>
    %32 = arith.select %8, %19, %27 : vector<8x128xi1>, vector<8x128xf32>
    %33 = arith.mulf %32, %28 : vector<8x128xf32>
    %cst_10 = arith.constant 0.000000e+00 : f32
    %34 = vector.broadcast %cst_10 : f32 to vector<8x128xf32>
    %35 = arith.subf %34, %19 : vector<8x128xf32>
    %36 = arith.select %8, %35, %27 : vector<8x128xi1>, vector<8x128xf32>
    %37 = arith.mulf %36, %14 : vector<8x128xf32>
    %38 = arith.select %8, %24, %18 : vector<8x128xi1>, vector<8x128xf32>
    %39 = arith.select %8, %27, %19 : vector<8x128xi1>, vector<8x128xf32>
    %40 = arith.mulf %39, %28 : vector<8x128xf32>
    %cst_11 = arith.constant 0.000000e+00 : f32
    %41 = vector.broadcast %cst_11 : f32 to vector<8x128xf32>
    %42 = arith.subf %41, %19 : vector<8x128xf32>
    %43 = arith.select %8, %27, %42 : vector<8x128xi1>, vector<8x128xf32>
    %44 = arith.mulf %43, %14 : vector<8x128xf32>
    %c0_12 = arith.constant 0 : index
    %c0_13 = arith.constant 0 : index
    %c0_14 = arith.constant 0 : index
    %45 = vector.load %arg3[%c0_12, %c0_13, %c0_14] : memref<36x8x128xf32, #tpu.memory_space<vmem>>, vector<1x8x128xf32>
    %46 = vector.shape_cast %45 : vector<1x8x128xf32> to vector<8x128xf32>
    %47 = vector.shape_cast %31 : vector<8x128xf32> to vector<1x8x128xf32>
    tpu.vector_store %arg3[%c0_12, %c0_13, %c0_14], %47 {strides = array<i32>} : memref<36x8x128xf32, #tpu.memory_space<vmem>>, vector<1x8x128xf32>,
    %c1 = arith.constant 1 : index
    %c0_15 = arith.constant 0 : index
    %c0_16 = arith.constant 0 : index
    %48 = vector.load %arg3[%c1, %c0_15, %c0_16] : memref<36x8x128xf32, #tpu.memory_space<vmem>>, vector<1x8x128xf32>
    %49 = vector.shape_cast %48 : vector<1x8x128xf32> to vector<8x128xf32>
    %50 = vector.shape_cast %33 : vector<8x128xf32> to vector<1x8x128xf32>
    tpu.vector_store %arg3[%c1, %c0_15, %c0_16], %50 {strides = array<i32>} : memref<36x8x128xf32, #tpu.memory_space<vmem>>, vector<1x8x128xf32>,
    %c2 = arith.constant 2 : index
    %c0_17 = arith.constant 0 : index
    %c0_18 = arith.constant 0 : index
    %51 = vector.load %arg3[%c2, %c0_17, %c0_18] : memref<36x8x128xf32, #tpu.memory_space<vmem>>, vector<1x8x128xf32>
    %52 = vector.shape_cast %51 : vector<1x8x128xf32> to vector<8x128xf32>
    %53 = vector.shape_cast %29 : vector<8x128xf32> to vector<1x8x128xf32>
    tpu.vector_store %arg3[%c2, %c0_17, %c0_18], %53 {strides = array<i32>} : memref<36x8x128xf32, #tpu.memory_space<vmem>>, vector<1x8x128xf32>,
    %c3 = arith.constant 3 : index
    %c0_19 = arith.constant 0 : index
    %c0_20 = arith.constant 0 : index
    %54 = vector.load %arg3[%c3, %c0_19, %c0_20] : memref<36x8x128xf32, #tpu.memory_space<vmem>>, vector<1x8x128xf32>
    %55 = vector.shape_cast %54 : vector<1x8x128xf32> to vector<8x128xf32>
    %56 = vector.shape_cast %29 : vector<8x128xf32> to vector<1x8x128xf32>
    tpu.vector_store %arg3[%c3, %c0_19, %c0_20], %56 {strides = array<i32>} : memref<36x8x128xf32, #tpu.memory_space<vmem>>, vector<1x8x128xf32>,
    %c4 = arith.constant 4 : index
    %c0_21 = arith.constant 0 : index
    %c0_22 = arith.constant 0 : index
    %57 = vector.load %arg3[%c4, %c0_21, %c0_22] : memref<36x8x128xf32, #tpu.memory_space<vmem>>, vector<1x8x128xf32>
    %58 = vector.shape_cast %57 : vector<1x8x128xf32> to vector<8x128xf32>
    %59 = vector.shape_cast %29 : vector<8x128xf32> to vector<1x8x128xf32>
    tpu.vector_store %arg3[%c4, %c0_21, %c0_22], %59 {strides = array<i32>} : memref<36x8x128xf32, #tpu.memory_space<vmem>>, vector<1x8x128xf32>,
    %c5 = arith.constant 5 : index
    %c0_23 = arith.constant 0 : index
    %c0_24 = arith.constant 0 : index
    %60 = vector.load %arg3[%c5, %c0_23, %c0_24] : memref<36x8x128xf32, #tpu.memory_space<vmem>>, vector<1x8x128xf32>
    %61 = vector.shape_cast %60 : vector<1x8x128xf32> to vector<8x128xf32>
    %62 = vector.shape_cast %29 : vector<8x128xf32> to vector<1x8x128xf32>
    tpu.vector_store %arg3[%c5, %c0_23, %c0_24], %62 {strides = array<i32>} : memref<36x8x128xf32, #tpu.memory_space<vmem>>, vector<1x8x128xf32>,
    %c6 = arith.constant 6 : index
    %c0_25 = arith.constant 0 : index
    %c0_26 = arith.constant 0 : index
    %63 = vector.load %arg3[%c6, %c0_25, %c0_26] : memref<36x8x128xf32, #tpu.memory_space<vmem>>, vector<1x8x128xf32>
    %64 = vector.shape_cast %63 : vector<1x8x128xf32> to vector<8x128xf32>
    %65 = vector.shape_cast %37 : vector<8x128xf32> to vector<1x8x128xf32>
    tpu.vector_store %arg3[%c6, %c0_25, %c0_26], %65 {strides = array<i32>} : memref<36x8x128xf32, #tpu.memory_space<vmem>>, vector<1x8x128xf32>,
    %c7 = arith.constant 7 : index
    %c0_27 = arith.constant 0 : index
    %c0_28 = arith.constant 0 : index
    %66 = vector.load %arg3[%c7, %c0_27, %c0_28] : memref<36x8x128xf32, #tpu.memory_space<vmem>>, vector<1x8x128xf32>
    %67 = vector.shape_cast %66 : vector<1x8x128xf32> to vector<8x128xf32>
    %68 = vector.shape_cast %31 : vector<8x128xf32> to vector<1x8x128xf32>
    tpu.vector_store %arg3[%c7, %c0_27, %c0_28], %68 {strides = array<i32>} : memref<36x8x128xf32, #tpu.memory_space<vmem>>, vector<1x8x128xf32>,
    %c8 = arith.constant 8 : index
    %c0_29 = arith.constant 0 : index
    %c0_30 = arith.constant 0 : index
    %69 = vector.load %arg3[%c8, %c0_29, %c0_30] : memref<36x8x128xf32, #tpu.memory_space<vmem>>, vector<1x8x128xf32>
    %70 = vector.shape_cast %69 : vector<1x8x128xf32> to vector<8x128xf32>
    %71 = vector.shape_cast %29 : vector<8x128xf32> to vector<1x8x128xf32>
    tpu.vector_store %arg3[%c8, %c0_29, %c0_30], %71 {strides = array<i32>} : memref<36x8x128xf32, #tpu.memory_space<vmem>>, vector<1x8x128xf32>,
    %c9 = arith.constant 9 : index
    %c0_31 = arith.constant 0 : index
    %c0_32 = arith.constant 0 : index
    %72 = vector.load %arg3[%c9, %c0_31, %c0_32] : memref<36x8x128xf32, #tpu.memory_space<vmem>>, vector<1x8x128xf32>
    %73 = vector.shape_cast %72 : vector<1x8x128xf32> to vector<8x128xf32>
    %74 = vector.shape_cast %29 : vector<8x128xf32> to vector<1x8x128xf32>
    tpu.vector_store %arg3[%c9, %c0_31, %c0_32], %74 {strides = array<i32>} : memref<36x8x128xf32, #tpu.memory_space<vmem>>, vector<1x8x128xf32>,
    %c10 = arith.constant 10 : index
    %c0_33 = arith.constant 0 : index
    %c0_34 = arith.constant 0 : index
    %75 = vector.load %arg3[%c10, %c0_33, %c0_34] : memref<36x8x128xf32, #tpu.memory_space<vmem>>, vector<1x8x128xf32>
    %76 = vector.shape_cast %75 : vector<1x8x128xf32> to vector<8x128xf32>
    %77 = vector.shape_cast %29 : vector<8x128xf32> to vector<1x8x128xf32>
    tpu.vector_store %arg3[%c10, %c0_33, %c0_34], %77 {strides = array<i32>} : memref<36x8x128xf32, #tpu.memory_space<vmem>>, vector<1x8x128xf32>,
    %c11 = arith.constant 11 : index
    %c0_35 = arith.constant 0 : index
    %c0_36 = arith.constant 0 : index
    %78 = vector.load %arg3[%c11, %c0_35, %c0_36] : memref<36x8x128xf32, #tpu.memory_space<vmem>>, vector<1x8x128xf32>
    %79 = vector.shape_cast %78 : vector<1x8x128xf32> to vector<8x128xf32>
    %80 = vector.shape_cast %29 : vector<8x128xf32> to vector<1x8x128xf32>
    tpu.vector_store %arg3[%c11, %c0_35, %c0_36], %80 {strides = array<i32>} : memref<36x8x128xf32, #tpu.memory_space<vmem>>, vector<1x8x128xf32>,
    %c12 = arith.constant 12 : index
    %c0_37 = arith.constant 0 : index
    %c0_38 = arith.constant 0 : index
    %81 = vector.load %arg3[%c12, %c0_37, %c0_38] : memref<36x8x128xf32, #tpu.memory_space<vmem>>, vector<1x8x128xf32>
    %82 = vector.shape_cast %81 : vector<1x8x128xf32> to vector<8x128xf32>
    %83 = vector.shape_cast %29 : vector<8x128xf32> to vector<1x8x128xf32>
    tpu.vector_store %arg3[%c12, %c0_37, %c0_38], %83 {strides = array<i32>} : memref<36x8x128xf32, #tpu.memory_space<vmem>>, vector<1x8x128xf32>,
    %c13 = arith.constant 13 : index
    %c0_39 = arith.constant 0 : index
    %c0_40 = arith.constant 0 : index
    %84 = vector.load %arg3[%c13, %c0_39, %c0_40] : memref<36x8x128xf32, #tpu.memory_space<vmem>>, vector<1x8x128xf32>
    %85 = vector.shape_cast %84 : vector<1x8x128xf32> to vector<8x128xf32>
    %86 = vector.shape_cast %29 : vector<8x128xf32> to vector<1x8x128xf32>
    tpu.vector_store %arg3[%c13, %c0_39, %c0_40], %86 {strides = array<i32>} : memref<36x8x128xf32, #tpu.memory_space<vmem>>, vector<1x8x128xf32>,
    %c14 = arith.constant 14 : index
    %c0_41 = arith.constant 0 : index
    %c0_42 = arith.constant 0 : index
    %87 = vector.load %arg3[%c14, %c0_41, %c0_42] : memref<36x8x128xf32, #tpu.memory_space<vmem>>, vector<1x8x128xf32>
    %88 = vector.shape_cast %87 : vector<1x8x128xf32> to vector<8x128xf32>
    %89 = vector.shape_cast %38 : vector<8x128xf32> to vector<1x8x128xf32>
    tpu.vector_store %arg3[%c14, %c0_41, %c0_42], %89 {strides = array<i32>} : memref<36x8x128xf32, #tpu.memory_space<vmem>>, vector<1x8x128xf32>,
    %c15 = arith.constant 15 : index
    %c0_43 = arith.constant 0 : index
    %c0_44 = arith.constant 0 : index
    %90 = vector.load %arg3[%c15, %c0_43, %c0_44] : memref<36x8x128xf32, #tpu.memory_space<vmem>>, vector<1x8x128xf32>
    %91 = vector.shape_cast %90 : vector<1x8x128xf32> to vector<8x128xf32>
    %92 = vector.shape_cast %40 : vector<8x128xf32> to vector<1x8x128xf32>
    tpu.vector_store %arg3[%c15, %c0_43, %c0_44], %92 {strides = array<i32>} : memref<36x8x128xf32, #tpu.memory_space<vmem>>, vector<1x8x128xf32>,
    %c16 = arith.constant 16 : index
    %c0_45 = arith.constant 0 : index
    %c0_46 = arith.constant 0 : index
    %93 = vector.load %arg3[%c16, %c0_45, %c0_46] : memref<36x8x128xf32, #tpu.memory_space<vmem>>, vector<1x8x128xf32>
    %94 = vector.shape_cast %93 : vector<1x8x128xf32> to vector<8x128xf32>
    %95 = vector.shape_cast %29 : vector<8x128xf32> to vector<1x8x128xf32>
    tpu.vector_store %arg3[%c16, %c0_45, %c0_46], %95 {strides = array<i32>} : memref<36x8x128xf32, #tpu.memory_space<vmem>>, vector<1x8x128xf32>,
    %c17 = arith.constant 17 : index
    %c0_47 = arith.constant 0 : index
    %c0_48 = arith.constant 0 : index
    %96 = vector.load %arg3[%c17, %c0_47, %c0_48] : memref<36x8x128xf32, #tpu.memory_space<vmem>>, vector<1x8x128xf32>
    %97 = vector.shape_cast %96 : vector<1x8x128xf32> to vector<8x128xf32>
    %98 = vector.shape_cast %29 : vector<8x128xf32> to vector<1x8x128xf32>
    tpu.vector_store %arg3[%c17, %c0_47, %c0_48], %98 {strides = array<i32>} : memref<36x8x128xf32, #tpu.memory_space<vmem>>, vector<1x8x128xf32>,
    %c18 = arith.constant 18 : index
    %c0_49 = arith.constant 0 : index
    %c0_50 = arith.constant 0 : index
    %99 = vector.load %arg3[%c18, %c0_49, %c0_50] : memref<36x8x128xf32, #tpu.memory_space<vmem>>, vector<1x8x128xf32>
    %100 = vector.shape_cast %99 : vector<1x8x128xf32> to vector<8x128xf32>
    %101 = vector.shape_cast %29 : vector<8x128xf32> to vector<1x8x128xf32>
    tpu.vector_store %arg3[%c18, %c0_49, %c0_50], %101 {strides = array<i32>} : memref<36x8x128xf32, #tpu.memory_space<vmem>>, vector<1x8x128xf32>,
    %c19 = arith.constant 19 : index
    %c0_51 = arith.constant 0 : index
    %c0_52 = arith.constant 0 : index
    %102 = vector.load %arg3[%c19, %c0_51, %c0_52] : memref<36x8x128xf32, #tpu.memory_space<vmem>>, vector<1x8x128xf32>
    %103 = vector.shape_cast %102 : vector<1x8x128xf32> to vector<8x128xf32>
    %104 = vector.shape_cast %29 : vector<8x128xf32> to vector<1x8x128xf32>
    tpu.vector_store %arg3[%c19, %c0_51, %c0_52], %104 {strides = array<i32>} : memref<36x8x128xf32, #tpu.memory_space<vmem>>, vector<1x8x128xf32>,
    %c20 = arith.constant 20 : index
    %c0_53 = arith.constant 0 : index
    %c0_54 = arith.constant 0 : index
    %105 = vector.load %arg3[%c20, %c0_53, %c0_54] : memref<36x8x128xf32, #tpu.memory_space<vmem>>, vector<1x8x128xf32>
    %106 = vector.shape_cast %105 : vector<1x8x128xf32> to vector<8x128xf32>
    %107 = vector.shape_cast %44 : vector<8x128xf32> to vector<1x8x128xf32>
    tpu.vector_store %arg3[%c20, %c0_53, %c0_54], %107 {strides = array<i32>} : memref<36x8x128xf32, #tpu.memory_space<vmem>>, vector<1x8x128xf32>,
    %c21 = arith.constant 21 : index
    %c0_55 = arith.constant 0 : index
    %c0_56 = arith.constant 0 : index
    %108 = vector.load %arg3[%c21, %c0_55, %c0_56] : memref<36x8x128xf32, #tpu.memory_space<vmem>>, vector<1x8x128xf32>
    %109 = vector.shape_cast %108 : vector<1x8x128xf32> to vector<8x128xf32>
    %110 = vector.shape_cast %38 : vector<8x128xf32> to vector<1x8x128xf32>
    tpu.vector_store %arg3[%c21, %c0_55, %c0_56], %110 {strides = array<i32>} : memref<36x8x128xf32, #tpu.memory_space<vmem>>, vector<1x8x128xf32>,
    %c22 = arith.constant 22 : index
    %c0_57 = arith.constant 0 : index
    %c0_58 = arith.constant 0 : index
    %111 = vector.load %arg3[%c22, %c0_57, %c0_58] : memref<36x8x128xf32, #tpu.memory_space<vmem>>, vector<1x8x128xf32>
    %112 = vector.shape_cast %111 : vector<1x8x128xf32> to vector<8x128xf32>
    %113 = vector.shape_cast %29 : vector<8x128xf32> to vector<1x8x128xf32>
    tpu.vector_store %arg3[%c22, %c0_57, %c0_58], %113 {strides = array<i32>} : memref<36x8x128xf32, #tpu.memory_space<vmem>>, vector<1x8x128xf32>,
    %c23 = arith.constant 23 : index
    %c0_59 = arith.constant 0 : index
    %c0_60 = arith.constant 0 : index
    %114 = vector.load %arg3[%c23, %c0_59, %c0_60] : memref<36x8x128xf32, #tpu.memory_space<vmem>>, vector<1x8x128xf32>
    %115 = vector.shape_cast %114 : vector<1x8x128xf32> to vector<8x128xf32>
    %116 = vector.shape_cast %29 : vector<8x128xf32> to vector<1x8x128xf32>
    tpu.vector_store %arg3[%c23, %c0_59, %c0_60], %116 {strides = array<i32>} : memref<36x8x128xf32, #tpu.memory_space<vmem>>, vector<1x8x128xf32>,
    %c24 = arith.constant 24 : index
    %c0_61 = arith.constant 0 : index
    %c0_62 = arith.constant 0 : index
    %117 = vector.load %arg3[%c24, %c0_61, %c0_62] : memref<36x8x128xf32, #tpu.memory_space<vmem>>, vector<1x8x128xf32>
    %118 = vector.shape_cast %117 : vector<1x8x128xf32> to vector<8x128xf32>
    %119 = vector.shape_cast %29 : vector<8x128xf32> to vector<1x8x128xf32>
    tpu.vector_store %arg3[%c24, %c0_61, %c0_62], %119 {strides = array<i32>} : memref<36x8x128xf32, #tpu.memory_space<vmem>>, vector<1x8x128xf32>,
    %c25 = arith.constant 25 : index
    %c0_63 = arith.constant 0 : index
    %c0_64 = arith.constant 0 : index
    %120 = vector.load %arg3[%c25, %c0_63, %c0_64] : memref<36x8x128xf32, #tpu.memory_space<vmem>>, vector<1x8x128xf32>
    %121 = vector.shape_cast %120 : vector<1x8x128xf32> to vector<8x128xf32>
    %122 = vector.shape_cast %29 : vector<8x128xf32> to vector<1x8x128xf32>
    tpu.vector_store %arg3[%c25, %c0_63, %c0_64], %122 {strides = array<i32>} : memref<36x8x128xf32, #tpu.memory_space<vmem>>, vector<1x8x128xf32>,
    %c26 = arith.constant 26 : index
    %c0_65 = arith.constant 0 : index
    %c0_66 = arith.constant 0 : index
    %123 = vector.load %arg3[%c26, %c0_65, %c0_66] : memref<36x8x128xf32, #tpu.memory_space<vmem>>, vector<1x8x128xf32>
    %124 = vector.shape_cast %123 : vector<1x8x128xf32> to vector<8x128xf32>
    %125 = vector.shape_cast %29 : vector<8x128xf32> to vector<1x8x128xf32>
    tpu.vector_store %arg3[%c26, %c0_65, %c0_66], %125 {strides = array<i32>} : memref<36x8x128xf32, #tpu.memory_space<vmem>>, vector<1x8x128xf32>,
    %c27 = arith.constant 27 : index
    %c0_67 = arith.constant 0 : index
    %c0_68 = arith.constant 0 : index
    %126 = vector.load %arg3[%c27, %c0_67, %c0_68] : memref<36x8x128xf32, #tpu.memory_space<vmem>>, vector<1x8x128xf32>
    %127 = vector.shape_cast %126 : vector<1x8x128xf32> to vector<8x128xf32>
    %128 = vector.shape_cast %29 : vector<8x128xf32> to vector<1x8x128xf32>
    tpu.vector_store %arg3[%c27, %c0_67, %c0_68], %128 {strides = array<i32>} : memref<36x8x128xf32, #tpu.memory_space<vmem>>, vector<1x8x128xf32>,
    %c28 = arith.constant 28 : index
    %c0_69 = arith.constant 0 : index
    %c0_70 = arith.constant 0 : index
    %129 = vector.load %arg3[%c28, %c0_69, %c0_70] : memref<36x8x128xf32, #tpu.memory_space<vmem>>, vector<1x8x128xf32>
    %130 = vector.shape_cast %129 : vector<1x8x128xf32> to vector<8x128xf32>
    %131 = vector.shape_cast %30 : vector<8x128xf32> to vector<1x8x128xf32>
    tpu.vector_store %arg3[%c28, %c0_69, %c0_70], %131 {strides = array<i32>} : memref<36x8x128xf32, #tpu.memory_space<vmem>>, vector<1x8x128xf32>,
    %c29 = arith.constant 29 : index
    %c0_71 = arith.constant 0 : index
    %c0_72 = arith.constant 0 : index
    %132 = vector.load %arg3[%c29, %c0_71, %c0_72] : memref<36x8x128xf32, #tpu.memory_space<vmem>>, vector<1x8x128xf32>
    %133 = vector.shape_cast %132 : vector<1x8x128xf32> to vector<8x128xf32>
    %134 = vector.shape_cast %29 : vector<8x128xf32> to vector<1x8x128xf32>
    tpu.vector_store %arg3[%c29, %c0_71, %c0_72], %134 {strides = array<i32>} : memref<36x8x128xf32, #tpu.memory_space<vmem>>, vector<1x8x128xf32>,
    %c30 = arith.constant 30 : index
    %c0_73 = arith.constant 0 : index
    %c0_74 = arith.constant 0 : index
    %135 = vector.load %arg3[%c30, %c0_73, %c0_74] : memref<36x8x128xf32, #tpu.memory_space<vmem>>, vector<1x8x128xf32>
    %136 = vector.shape_cast %135 : vector<1x8x128xf32> to vector<8x128xf32>
    %137 = vector.shape_cast %29 : vector<8x128xf32> to vector<1x8x128xf32>
    tpu.vector_store %arg3[%c30, %c0_73, %c0_74], %137 {strides = array<i32>} : memref<36x8x128xf32, #tpu.memory_space<vmem>>, vector<1x8x128xf32>,
    %c31 = arith.constant 31 : index
    %c0_75 = arith.constant 0 : index
    %c0_76 = arith.constant 0 : index
    %138 = vector.load %arg3[%c31, %c0_75, %c0_76] : memref<36x8x128xf32, #tpu.memory_space<vmem>>, vector<1x8x128xf32>
    %139 = vector.shape_cast %138 : vector<1x8x128xf32> to vector<8x128xf32>
    %140 = vector.shape_cast %29 : vector<8x128xf32> to vector<1x8x128xf32>
    tpu.vector_store %arg3[%c31, %c0_75, %c0_76], %140 {strides = array<i32>} : memref<36x8x128xf32, #tpu.memory_space<vmem>>, vector<1x8x128xf32>,
    %c32 = arith.constant 32 : index
    %c0_77 = arith.constant 0 : index
    %c0_78 = arith.constant 0 : index
    %141 = vector.load %arg3[%c32, %c0_77, %c0_78] : memref<36x8x128xf32, #tpu.memory_space<vmem>>, vector<1x8x128xf32>
    %142 = vector.shape_cast %141 : vector<1x8x128xf32> to vector<8x128xf32>
    %143 = vector.shape_cast %29 : vector<8x128xf32> to vector<1x8x128xf32>
    tpu.vector_store %arg3[%c32, %c0_77, %c0_78], %143 {strides = array<i32>} : memref<36x8x128xf32, #tpu.memory_space<vmem>>, vector<1x8x128xf32>,
    %c33 = arith.constant 33 : index
    %c0_79 = arith.constant 0 : index
    %c0_80 = arith.constant 0 : index
    %144 = vector.load %arg3[%c33, %c0_79, %c0_80] : memref<36x8x128xf32, #tpu.memory_space<vmem>>, vector<1x8x128xf32>
    %145 = vector.shape_cast %144 : vector<1x8x128xf32> to vector<8x128xf32>
    %146 = vector.shape_cast %29 : vector<8x128xf32> to vector<1x8x128xf32>
    tpu.vector_store %arg3[%c33, %c0_79, %c0_80], %146 {strides = array<i32>} : memref<36x8x128xf32, #tpu.memory_space<vmem>>, vector<1x8x128xf32>,
    %c34 = arith.constant 34 : index
    %c0_81 = arith.constant 0 : index
    %c0_82 = arith.constant 0 : index
    %147 = vector.load %arg3[%c34, %c0_81, %c0_82] : memref<36x8x128xf32, #tpu.memory_space<vmem>>, vector<1x8x128xf32>
    %148 = vector.shape_cast %147 : vector<1x8x128xf32> to vector<8x128xf32>
    %149 = vector.shape_cast %29 : vector<8x128xf32> to vector<1x8x128xf32>
    tpu.vector_store %arg3[%c34, %c0_81, %c0_82], %149 {strides = array<i32>} : memref<36x8x128xf32, #tpu.memory_space<vmem>>, vector<1x8x128xf32>,
    %c35 = arith.constant 35 : index
    %c0_83 = arith.constant 0 : index
    %c0_84 = arith.constant 0 : index
    %150 = vector.load %arg3[%c35, %c0_83, %c0_84] : memref<36x8x128xf32, #tpu.memory_space<vmem>>, vector<1x8x128xf32>
    %151 = vector.shape_cast %150 : vector<1x8x128xf32> to vector<8x128xf32>
    %152 = vector.shape_cast %30 : vector<8x128xf32> to vector<1x8x128xf32>
    tpu.vector_store %arg3[%c35, %c0_83, %c0_84], %152 {strides = array<i32>} : memref<36x8x128xf32, #tpu.memory_space<vmem>>, vector<1x8x128xf32>,
    return
  }
  func.func @transform_0(%arg0: i32) -> i32 {
    %c0_i32 = arith.constant 0 : i32
    %c0_i32_0 = arith.constant 0 : i32
    return %c0_i32 : i32
  }
  func.func @transform_1(%arg0: i32) -> (i32, i32) {
    %c0_i32 = arith.constant 0 : i32
    %c0_i32_0 = arith.constant 0 : i32
    return %c0_i32, %arg0 : i32, i32
  }
  func.func @transform_2(%arg0: i32) -> (i32, i32, i32) {
    %c0_i32 = arith.constant 0 : i32
    %c0_i32_0 = arith.constant 0 : i32
    %c0_i32_1 = arith.constant 0 : i32
    return %c0_i32, %c0_i32_0, %arg0 : i32, i32, i32
  }
}

</mosaic_0001>

<llo_original>
// kernel: tpu_custom_call.1
$region0: #{tpu_custom_call.1}
  #allocation0 [shape = 'u32[]', space=smem, size = 0x4, offset = 0x4, fixed_abs, tag = 'smem constant byte address 0x4 - core index']
  #allocation1 [shape = 'u32[144,128]{1,0:T(1,128)}', space=vmem, size = 0x12000, scoped, tag = 'internal scratch']
  #allocation2 [shape = 'f32[1]{0:T(128)S(6)}', space=smem, size = 0x200, scoped, tag = 'scoped memory for tpu_custom_call.1']
  %s0 = inlined_call_operand.<no memory space> [shape: f32[1], index: 0, kind: input, shape index: {}]
  %s1 = inlined_call_operand.hbm [shape: f32[8,128], index: 1, kind: input, shape index: {}]
  %s2 = inlined_call_operand.hbm [shape: f32[36,8,128], index: 2, kind: output, shape index: {}]
  %s3 = sld [smem:[#allocation0]]
  $region22: #{tpu_custom_call.1} parent=0
    _
  %s5 = ssub.s32 1, %s3
  %s6 = scalar_select 0, %s5, %s3
  %7 = sst [smem:[#allocation2]] %s0
  $region1: #{tpu_custom_call.1} parent=0
    #allocation3 [shape = 'u8[4096]{0}', space=vmem, size = 0x1000, scoped, tag = 'input window, operand 1, single buffered']
    #allocation4 [shape = 's32[1]{0}', space=sflag, size = 0x4, scoped, tag = 'scoped memory for tpu_custom_call.1']
    #allocation5 [shape = 's32[1]{0}', space=sflag, size = 0x4, scoped, tag = 'scoped memory for tpu_custom_call.1']
    #allocation6 [shape = 'u8[147456]{0}', space=vmem, size = 0x24000, scoped, tag = 'output window, operand 0, single buffered']
    %8 = vsyncpa [#allocation4], 0
    %9 = vsyncpa [#allocation5], 0
    // Predicated region
    $region2: #{tpu_custom_call.1} parent=1 // pred_check
      _
    $region3: #{tpu_custom_call.1} parent=1 // pred_check_branch
      %11 = sbr.rel (0) target = $region5
    $region4: #{tpu_custom_call.1} parent=1 // pred_region
      _
    $region5: #{tpu_custom_call.1} parent=1 // pred_fallthru
      _
    // Predicated region
    $region6: #{tpu_custom_call.1} parent=1 // pred_check
      _
    $region7: #{tpu_custom_call.1} parent=1 // pred_check_branch
      %13 = sbr.rel (0) target = $region9
    $region8: #{tpu_custom_call.1} parent=1 // pred_region
      %s15 = ssub.s32 128, 128
      %16 = vsyncadd [#allocation4], %s15
      %s18 = sshll.u32 [#allocation3], 4
      %s19 = int_to_ptr.vmem [resolvable:$true] %s18
      %21 = dma.hbm_to_vmem [thread:$0]  %s1, 128, %s19, [#allocation4]
    $region9: #{tpu_custom_call.1} parent=1 // pred_fallthru
      _
    // Predicated region
    $region10: #{tpu_custom_call.1} parent=1 // pred_check
      _
    $region11: #{tpu_custom_call.1} parent=1 // pred_check_branch
      %23 = sbr.rel (0) target = $region13
    $region12: #{tpu_custom_call.1} parent=1 // pred_region
      %24 = dma.done [#allocation4], 128
    $region13: #{tpu_custom_call.1} parent=1 // pred_fallthru
      _
    %v25 = vld [vmem:[#allocation3] sm:$0xff]
    %v26 = vand.u32 2147483647, %v25
    %vm27 = vcmp.lt.f32.partialorder %v26, 1e-06
    %v28 = vadd.f32 %v25, 1e-06
    %v29 = vsel %vm27, %v28, %v25
    %vm30 = vcmp.ge.f32.partialorder %v29, 0.0
    %vm31 = vcmp.lt.f32.partialorder %v29, 0.0
    %v32 = vsub.f32 0.0, %v29
    %v33 = vsel %vm31, %v32, %v29
    %v34 = vrsqrt.pop %v33
    %v35 = vmul.f32 %v33, %v34
    %vm36 = vcmp.eq.f32.partialorder %v33, inf
    %v37 = vsel %vm36, %v33, %v35
    %vm38 = vcmp.eq.f32.partialorder %v33, 0.0
    %v39 = vand.u32 %v33, 2147483648
    %v40 = vsel %vm38, %v39, %v37
    %s41 = sld [smem:[#allocation2]]
    %v42 = vstv %s41
    %v43 = vmul.f32 %v42, %v40
    %v44 = vand.u32 2147483647, %v43
    %vm45 = vcmp.le.f32.partialorder %v44, 0.7853982
    %vm46 = vcmp.lt.s32.totalorder %v43, 0
    %v47 = vand.u32 %v43, 2139095040
    %v48 = vshrl.u32 %v47, 23
    %v49 = vsub.s32 %v48, 127
    %v50 = vand.u32 2147483647, %v43
    %v51 = vand.u32 %v50, 8388607
    %v52 = vor.u32 %v51, 8388608
    %v53 = vsub.s32 0, %v52
    %v54 = vadd.s32 %v49, 1
    %vm55 = vcmp.gt.s32.totalorder %v54, 0
    %v56 = vsel %vm55, %v54, 0
    %v57 = vshrl.u32 %v56, 5
    %v58 = vand.u32 %v56, 31
    %v59 = vsub.s32 32, %v58
    %v60 = vshrl.u32 683565275, %v59
    %v61 = vshll.u32 683565275, %v58
    %v62 = vshrl.u32 2475754826, %v59
    %v63 = vor.u32 %v61, %v62
    %v64 = vshll.u32 2475754826, %v58
    %v65 = vshrl.u32 2131351028, %v59
    %v66 = vor.u32 %v64, %v65
    %v67 = vshll.u32 2131351028, %v58
    %v68 = vshrl.u32 2102212464, %v59
    %v69 = vor.u32 %v67, %v68
    %v70 = vshll.u32 2102212464, %v58
    %v71 = vshrl.u32 920167782, %v59
    %v72 = vor.u32 %v70, %v71
    %v73 = vshll.u32 920167782, %v58
    %v74 = vshrl.u32 1326507024, %v59
    %v75 = vor.u32 %v73, %v74
    %vm76 = vcmp.lt.s32.totalorder %v57, 1
    %vm77 = vcmp.lt.s32.totalorder %v57, 2
    %vm78 = vcmp.lt.s32.totalorder %v57, 3
    %vm79 = vcmp.lt.s32.totalorder %v57, 4
    %v80 = vsel %vm76, %v60, %v63
    %v81 = vsel %vm79, %v69, 2102212464
    %v82 = vsel %vm78, %v66, %v81
    %v83 = vsel %vm77, %v80, %v82
    %v84 = vsel %vm76, %v63, %v66
    %v85 = vsel %vm79, %v72, 920167782
    %v86 = vsel %vm78, %v69, %v85
    %v87 = vsel %vm77, %v84, %v86
    %v88 = vsel %vm76, %v66, %v69
    %v89 = vsel %vm79, %v75, 1326507024
    %v90 = vsel %vm78, %v72, %v89
    %v91 = vsel %vm77, %v88, %v90
    %v92 = vshll.u32 %v52, 8
    %v93 = vmul.u32.u64.compose %v92, %v91
    %v94 = vextract.low.u32 %v93
    %v95 = vextract.high.u32 %v93
    %v96 = vmul.u32.u64.compose %v92, %v87
    %v97 = vextract.low.u32 %v96
    %v98 = vextract.high.u32 %v96
    %v99 = vmul.u32 %v92, %v83
    %v100 = vadd.s32 %v95, %v97
    %vm101 = vc.u32 %v95, %v97
    %v102 = vadd.s32 %v98, 1
    %v103 = vsel %vm101, %v102, %v98
    %v104 = vadd.s32 %v99, %v103
    %v105 = vadd.s32 %v104, 536870912
    %v106 = vshrl.u32 %v105, 30
    %v107 = vshll.u32 %v106, 30
    %v108 = vsub.s32 %v104, %v107
    %vm109 = vcmp.lt.s32.totalorder %v108, 0
    %v110 = vsub.s32 0, %v108
    %v111 = vsel %vm109, %v110, %v108
    %v112 = vclz %v111
    %v113 = vsub.s32 %v112, 2
    %vm114 = vcmp.gt.s32.totalorder 0, %v113
    %v115 = vsel %vm114, 0, %v113
    %v116 = vsub.s32 32, %v115
    %v117 = vshll.u32 %v108, %v115
    %v118 = vshrl.u32 %v100, %v116
    %v119 = vor.u32 %v117, %v118
    %v120 = vsub.s32 4294967266, %v115
    %v121 = vadd.s32 %v120, 127
    %v122 = vshll.u32 %v121, 23
    %v123 = vor.u32 4788187, %v122
    %v124 = vand.u32 2147483647, %v123
    %v126 = vcvt.s32.f32 %v119
    %v127 = vmul.f32 %v126, %v124
    %v128 = vxor.u32 %v127, 2147483648
    %v129 = vsel %vm46, %v128, %v127
    %v130 = vsub.s32 4, %v106
    %v131 = vsel %vm46, %v130, %v106
    %v132 = vsel %vm45, %v43, %v129
    %v133 = vsel %vm45, 0, %v131
    %v134 = vcosq.f32.pop %v132
    %v135 = vsinq.f32.pop %v132
    %vm136 = vweird.f32 %v43
    %v137 = vand.u32 %v133, 3
    %vm138 = vcmp.lt.s32.totalorder %v137, 2
    %vm139 = vcmp.eq.s32.totalorder %v137, 0
    %v140 = vxor.u32 %v135, 2147483648
    %v141 = vsel %vm139, %v134, %v140
    %vm142 = vcmp.eq.s32.totalorder %v137, 2
    %v143 = vxor.u32 %v134, 2147483648
    %v144 = vsel %vm142, %v143, %v135
    %v145 = vsel %vm138, %v141, %v144
    %v146 = vsel %vm136, nan, %v145
    %v147 = vand.u32 2147483647, %v43
    %vm148 = vcmp.le.f32.partialorder %v147, 0.7853982
    %vm149 = vcmp.lt.s32.totalorder %v43, 0
    %v150 = vand.u32 %v43, 2139095040
    %v151 = vshrl.u32 %v150, 23
    %v152 = vsub.s32 %v151, 127
    %v153 = vand.u32 2147483647, %v43
    %v154 = vand.u32 %v153, 8388607
    %v155 = vor.u32 %v154, 8388608
    %v156 = vsub.s32 0, %v155
    %v157 = vadd.s32 %v152, 1
    %vm158 = vcmp.gt.s32.totalorder %v157, 0
    %v159 = vsel %vm158, %v157, 0
    %v160 = vshrl.u32 %v159, 5
    %v161 = vand.u32 %v159, 31
    %v162 = vsub.s32 32, %v161
    %v163 = vshrl.u32 683565275, %v162
    %v164 = vshll.u32 683565275, %v161
    %v165 = vshrl.u32 2475754826, %v162
    %v166 = vor.u32 %v164, %v165
    %v167 = vshll.u32 2475754826, %v161
    %v168 = vshrl.u32 2131351028, %v162
    %v169 = vor.u32 %v167, %v168
    %v170 = vshll.u32 2131351028, %v161
    %v171 = vshrl.u32 2102212464, %v162
    %v172 = vor.u32 %v170, %v171
    %v173 = vshll.u32 2102212464, %v161
    %v174 = vshrl.u32 920167782, %v162
    %v175 = vor.u32 %v173, %v174
    %v176 = vshll.u32 920167782, %v161
    %v177 = vshrl.u32 1326507024, %v162
    %v178 = vor.u32 %v176, %v177
    %vm179 = vcmp.lt.s32.totalorder %v160, 1
    %vm180 = vcmp.lt.s32.totalorder %v160, 2
    %vm181 = vcmp.lt.s32.totalorder %v160, 3
    %vm182 = vcmp.lt.s32.totalorder %v160, 4
    %v183 = vsel %vm179, %v163, %v166
    %v184 = vsel %vm182, %v172, 2102212464
    %v185 = vsel %vm181, %v169, %v184
    %v186 = vsel %vm180, %v183, %v185
    %v187 = vsel %vm179, %v166, %v169
    %v188 = vsel %vm182, %v175, 920167782
    %v189 = vsel %vm181, %v172, %v188
    %v190 = vsel %vm180, %v187, %v189
    %v191 = vsel %vm179, %v169, %v172
    %v192 = vsel %vm182, %v178, 1326507024
    %v193 = vsel %vm181, %v175, %v192
    %v194 = vsel %vm180, %v191, %v193
    %v195 = vshll.u32 %v155, 8
    %v196 = vmul.u32.u64.compose %v195, %v194
    %v197 = vextract.low.u32 %v196
    %v198 = vextract.high.u32 %v196
    %v199 = vmul.u32.u64.compose %v195, %v190
    %v200 = vextract.low.u32 %v199
    %v201 = vextract.high.u32 %v199
    %v202 = vmul.u32 %v195, %v186
    %v203 = vadd.s32 %v198, %v200
    %vm204 = vc.u32 %v198, %v200
    %v205 = vadd.s32 %v201, 1
    %v206 = vsel %vm204, %v205, %v201
    %v207 = vadd.s32 %v202, %v206
    %v208 = vadd.s32 %v207, 536870912
    %v209 = vshrl.u32 %v208, 30
    %v210 = vshll.u32 %v209, 30
    %v211 = vsub.s32 %v207, %v210
    %vm212 = vcmp.lt.s32.totalorder %v211, 0
    %v213 = vsub.s32 0, %v211
    %v214 = vsel %vm212, %v213, %v211
    %v215 = vclz %v214
    %v216 = vsub.s32 %v215, 2
    %vm217 = vcmp.gt.s32.totalorder 0, %v216
    %v218 = vsel %vm217, 0, %v216
    %v219 = vsub.s32 32, %v218
    %v220 = vshll.u32 %v211, %v218
    %v221 = vshrl.u32 %v203, %v219
    %v222 = vor.u32 %v220, %v221
    %v223 = vsub.s32 4294967266, %v218
    %v224 = vadd.s32 %v223, 127
    %v225 = vshll.u32 %v224, 23
    %v226 = vor.u32 4788187, %v225
    %v227 = vand.u32 2147483647, %v226
    %v229 = vcvt.s32.f32 %v222
    %v230 = vmul.f32 %v229, %v227
    %v231 = vxor.u32 %v230, 2147483648
    %v232 = vsel %vm149, %v231, %v230
    %v233 = vsub.s32 4, %v209
    %v234 = vsel %vm149, %v233, %v209
    %v235 = vsel %vm148, %v43, %v232
    %v236 = vsel %vm148, 0, %v234
    %v237 = vcosq.f32.pop %v235
    %v238 = vsinq.f32.pop %v235
    %vm239 = vweird.f32 %v43
    %v240 = vadd.s32 %v236, 3
    %v241 = vand.u32 %v240, 3
    %vm242 = vcmp.lt.s32.totalorder %v241, 2
    %vm243 = vcmp.eq.s32.totalorder %v241, 0
    %v244 = vxor.u32 %v238, 2147483648
    %v245 = vsel %vm243, %v237, %v244
    %vm246 = vcmp.eq.s32.totalorder %v241, 2
    %v247 = vxor.u32 %v237, 2147483648
    %v248 = vsel %vm246, %v247, %v238
    %v249 = vsel %vm242, %v245, %v248
    %v250 = vsel %vm239, nan, %v249
    %v251 = vmul.f32 %v43, 1.442695
    %v252 = vpow.pop %v251
    %v253 = vrcp.pop %v252
    %v254 = vadd.f32 %v252, %v253
    %v255 = vmul.f32 %v254, 0.5
    %v256 = vsub.f32 %v252, %v253
    %v257 = vmul.f32 %v256, 0.5
    %v258 = vrcp.pop %v40
    %v259 = vsel %vm30, %v146, %v255
    %v260 = vsel %vm30, %v250, %v257
    %v261 = vmul.f32 %v260, %v258
    %v262 = vsub.f32 0.0, %v250
    %v263 = vsel %vm30, %v262, %v257
    %v264 = vmul.f32 %v263, %v40
    %v265 = vsel %vm30, %v255, %v146
    %v266 = vsel %vm30, %v257, %v250
    %v267 = vmul.f32 %v266, %v258
    %v268 = vsel %vm30, %v257, %v262
    %v269 = vmul.f32 %v268, %v40
    %270 = vst [vmem:[#allocation6] sm:$0xff] %v259
    %s271 = scalar_lea.vmem [#allocation6], 8
    %272 = vst [vmem:[%s271] sm:$0xff] %v261
    %s273 = scalar_lea.vmem [#allocation6], 16
    %274 = vst [vmem:[%s273] sm:$0xff] 0.0
    %s275 = scalar_lea.vmem [#allocation6], 24
    %276 = vst [vmem:[%s275] sm:$0xff] 0.0
    %s277 = scalar_lea.vmem [#allocation6], 32
    %278 = vst [vmem:[%s277] sm:$0xff] 0.0
    %s279 = scalar_lea.vmem [#allocation6], 40
    %280 = vst [vmem:[%s279] sm:$0xff] 0.0
    %s281 = scalar_lea.vmem [#allocation6], 48
    %282 = vst [vmem:[%s281] sm:$0xff] %v264
    %s283 = scalar_lea.vmem [#allocation6], 56
    %284 = vst [vmem:[%s283] sm:$0xff] %v259
    %s285 = scalar_lea.vmem [#allocation6], 64
    %286 = vst [vmem:[%s285] sm:$0xff] 0.0
    %s287 = scalar_lea.vmem [#allocation6], 72
    %288 = vst [vmem:[%s287] sm:$0xff] 0.0
    %s289 = scalar_lea.vmem [#allocation6], 80
    %290 = vst [vmem:[%s289] sm:$0xff] 0.0
    %s291 = scalar_lea.vmem [#allocation6], 88
    %292 = vst [vmem:[%s291] sm:$0xff] 0.0
    %s293 = scalar_lea.vmem [#allocation6], 96
    %294 = vst [vmem:[%s293] sm:$0xff] 0.0
    %s295 = scalar_lea.vmem [#allocation6], 104
    %296 = vst [vmem:[%s295] sm:$0xff] 0.0
    %s297 = scalar_lea.vmem [#allocation6], 112
    %298 = vst [vmem:[%s297] sm:$0xff] %v265
    %s299 = scalar_lea.vmem [#allocation6], 120
    %300 = vst [vmem:[%s299] sm:$0xff] %v267
    %s301 = scalar_lea.vmem [#allocation6], 128
    %302 = vst [vmem:[%s301] sm:$0xff] 0.0
    %s303 = scalar_lea.vmem [#allocation6], 136
    %304 = vst [vmem:[%s303] sm:$0xff] 0.0
    %s305 = scalar_lea.vmem [#allocation6], 144
    %306 = vst [vmem:[%s305] sm:$0xff] 0.0
    %s307 = scalar_lea.vmem [#allocation6], 152
    %308 = vst [vmem:[%s307] sm:$0xff] 0.0
    %s309 = scalar_lea.vmem [#allocation6], 160
    %310 = vst [vmem:[%s309] sm:$0xff] %v269
    %s311 = scalar_lea.vmem [#allocation6], 168
    %312 = vst [vmem:[%s311] sm:$0xff] %v265
    %s313 = scalar_lea.vmem [#allocation6], 176
    %314 = vst [vmem:[%s313] sm:$0xff] 0.0
    %s315 = scalar_lea.vmem [#allocation6], 184
    %316 = vst [vmem:[%s315] sm:$0xff] 0.0
    %s317 = scalar_lea.vmem [#allocation6], 192
    %318 = vst [vmem:[%s317] sm:$0xff] 0.0
    %s319 = scalar_lea.vmem [#allocation6], 200
    %320 = vst [vmem:[%s319] sm:$0xff] 0.0
    %s321 = scalar_lea.vmem [#allocation6], 208
    %322 = vst [vmem:[%s321] sm:$0xff] 0.0
    %s323 = scalar_lea.vmem [#allocation6], 216
    %324 = vst [vmem:[%s323] sm:$0xff] 0.0
    %s325 = scalar_lea.vmem [#allocation6], 224
    %326 = vst [vmem:[%s325] sm:$0xff] 1.0
    %s327 = scalar_lea.vmem [#allocation6], 232
    %328 = vst [vmem:[%s327] sm:$0xff] 0.0
    %s329 = scalar_lea.vmem [#allocation6], 240
    %330 = vst [vmem:[%s329] sm:$0xff] 0.0
    %s331 = scalar_lea.vmem [#allocation6], 248
    %332 = vst [vmem:[%s331] sm:$0xff] 0.0
    %s333 = scalar_lea.vmem [#allocation6], 256
    %334 = vst [vmem:[%s333] sm:$0xff] 0.0
    %s335 = scalar_lea.vmem [#allocation6], 264
    %336 = vst [vmem:[%s335] sm:$0xff] 0.0
    %s337 = scalar_lea.vmem [#allocation6], 272
    %338 = vst [vmem:[%s337] sm:$0xff] 0.0
    %s339 = scalar_lea.vmem [#allocation6], 280
    %340 = vst [vmem:[%s339] sm:$0xff] 1.0
    // Predicated region
    $region14: #{tpu_custom_call.1} parent=1 // pred_check
      _
    $region15: #{tpu_custom_call.1} parent=1 // pred_check_branch
      %342 = sbr.rel (0) target = $region17
    $region16: #{tpu_custom_call.1} parent=1 // pred_region
      %s344 = ssub.s32 4608, 4608
      %345 = vsyncadd [#allocation5], %s344
      %s346 = sshll.u32 [#allocation6], 4
      %s347 = int_to_ptr.vmem [resolvable:$true] %s346
      %352 = dma.vmem_to_hbm [thread:$0]  %s347, 4608, %s2, [#allocation5], 128, 128, 8
    $region17: #{tpu_custom_call.1} parent=1 // pred_fallthru
      _
    // Predicated region
    $region18: #{tpu_custom_call.1} parent=1 // pred_check
      _
    $region19: #{tpu_custom_call.1} parent=1 // pred_check_branch
      %354 = sbr.rel (0) target = $region21
    $region20: #{tpu_custom_call.1} parent=1 // pred_region
      %355 = dma.done [#allocation5], 4608
    $region21: #{tpu_custom_call.1} parent=1 // pred_fallthru
      _
    %356 = vsyncpa [#allocation4], 1
    %357 = vsyncpa [#allocation5], 1

</llo_original>
